<compile_context>
chip_gen: v7x
topology: tpu7x:2x2x1
jax: 0.10.0
libtpu: 0.0.40
codegen_flags: <defaults>
</compile_context>

<pallas_src>
import math

import jax
import jax.numpy as jnp
from jax import lax
from jax.experimental import pallas as pl
from jax.experimental.pallas import tpu as pltpu

_VMEM_LIMIT = 32 * 1024 * 1024   # explicit scoped-VMEM budget (safe on v5e/v6e/v7x)


def _pick_hw_tile(hw, cap=1024):
    """Largest spatial tile <= cap obeying the (8,128)-or-full-extent rule."""
    if hw <= cap:
        return hw                        # full extent (always legal)
    for t in range(cap, 127, -128):      # multiples of 128 that divide hw
        if t % 128 == 0 and hw % t == 0:
            return t
    return hw                            # fallback: full extent


# --------------------- 1x1 lateral convs (non-final levels) ----------------- #

def _lateral_kernel(x_ref, wt_ref, b_ref, o_ref):
    """1x1 conv: (Cout,Cin) @ (Cin,THW) + bias, f32 accumulation."""
    y = jnp.dot(wt_ref[...], x_ref[0], preferred_element_type=jnp.float32)
    o_ref[0] = (y + b_ref[...]).astype(o_ref.dtype)


def _lateral_res_kernel(x_ref, wt_ref, b_ref, res_ref, o_ref):
    """1x1 conv fused with the FPN top-down residual add."""
    y = jnp.dot(wt_ref[...], x_ref[0], preferred_element_type=jnp.float32)
    o_ref[0] = (y + b_ref[...] + res_ref[0]).astype(o_ref.dtype)


def conv1x1(x_nchw, wt, b, res_nchw=None, *, compute_dtype=jnp.bfloat16):
    """Pointwise (1x1) conv in NCHW, optionally fused with a residual add.

    wt is (Cout, Cin).  Output is (N, Cout, H, W) in f32 (it feeds the
    top-down upsample path, which is accumulated in f32).
    """
    n, cin, h, w = x_nchw.shape
    cout = wt.shape[0]
    hw = h * w
    thw = _pick_hw_tile(hw)
    grid = (n, hw // thw)

    xf = x_nchw.reshape(n, cin, hw).astype(compute_dtype)
    wt_c = wt.astype(compute_dtype)
    b2 = b.reshape(cout, 1).astype(jnp.float32)

    x_spec = pl.BlockSpec((1, cin, thw), lambda i, j: (i, 0, j))
    w_spec = pl.BlockSpec((cout, cin), lambda i, j: (0, 0))      # resident
    b_spec = pl.BlockSpec((cout, 1), lambda i, j: (0, 0))        # resident
    o_spec = pl.BlockSpec((1, cout, thw), lambda i, j: (i, 0, j))
    cparams = pltpu.CompilerParams(
        dimension_semantics=("parallel", "parallel"),            # batch x spatial
        vmem_limit_bytes=_VMEM_LIMIT)

    if res_nchw is None:
        out = pl.pallas_call(
            _lateral_kernel,
            out_shape=jax.ShapeDtypeStruct((n, cout, hw), jnp.float32),
            grid=grid,
            in_specs=[x_spec, w_spec, b_spec],
            out_specs=o_spec,
            compiler_params=cparams,
        )(xf, wt_c, b2)
    else:
        res = res_nchw.reshape(n, cout, hw).astype(jnp.float32)
        r_spec = pl.BlockSpec((1, cout, thw), lambda i, j: (i, 0, j))
        out = pl.pallas_call(
            _lateral_res_kernel,
            out_shape=jax.ShapeDtypeStruct((n, cout, hw), jnp.float32),
            grid=grid,
            in_specs=[x_spec, w_spec, b_spec, r_spec],
            out_specs=o_spec,
            compiler_params=cparams,
        )(xf, wt_c, b2, res)
    return out.reshape(n, cout, h, w)


# ----------- Fused: last 1x1 lateral (+residual) + 3x3 refine conv ---------- #

def _make_fused_kernel(cout, l, wp, compute_dtype, with_res):
    """Kernel: lateral 1x1 conv (+bias, +optional residual), pad-ring mask,
    then 3x3 refine conv as 9 accumulated MXU dots over shifted flat windows."""

    def _refine(lat_c, wtap_ref, brefine_ref, o_ref):
        acc = jnp.zeros((cout, l), jnp.float32) + brefine_ref[...]
        for dy in range(3):                                  # 9 accumulated MXU dots
            for dx in range(3):
                s = dy * wp + dx
                acc = acc + jnp.dot(wtap_ref[3 * dy + dx], lat_c[:, s:s + l],
                                    preferred_element_type=jnp.float32)
        o_ref[0] = acc.astype(o_ref.dtype)

    if with_res:
        def kernel(x_ref, wlat_ref, blat_ref, res_ref, mask_ref,
                   wtap_ref, brefine_ref, o_ref):
            lat = jnp.dot(wlat_ref[...], x_ref[0],
                          preferred_element_type=jnp.float32)
            lat = (lat + blat_ref[...] + res_ref[0]) * mask_ref[...]
            _refine(lat.astype(compute_dtype), wtap_ref, brefine_ref, o_ref)
    else:
        def kernel(x_ref, wlat_ref, blat_ref, mask_ref,
                   wtap_ref, brefine_ref, o_ref):
            lat = jnp.dot(wlat_ref[...], x_ref[0],
                          preferred_element_type=jnp.float32)
            lat = (lat + blat_ref[...]) * mask_ref[...]
            _refine(lat.astype(compute_dtype), wtap_ref, brefine_ref, o_ref)

    return kernel


def lateral_refine_fused(x_nchw, wt_lat, b_lat, w_taps, b_refine,
                         res_nchw=None, *, compute_dtype=jnp.bfloat16):
    """Last lateral 1x1 conv (+optional residual) fused with the 3x3 refine conv.

    The intermediate lateral map lives only in VMEM: it is computed in f32,
    zeroed on the (1-wide) pad ring with a lane mask, cast to the compute
    dtype and consumed by the 9 shifted-window tap dots.  The flat output has
    lane length H*(W+2); the 2 junk columns per row are stripped in JAX.
    """
    n, cin, h, w = x_nchw.shape
    cout = wt_lat.shape[0]
    wp = w + 2
    l = h * wp                 # flat output length (incl. 2 junk cols per row)
    lp = (h + 3) * wp          # 1 top + 2 bottom pad rows keep shifted flat
                               # slices in-bounds for every tap

    xp = jnp.pad(x_nchw.astype(compute_dtype),
                 ((0, 0), (0, 0), (1, 2), (1, 1))).reshape(n, cin, lp)

    # Interior mask in the padded-flat layout (1 inside the HxW image, 0 on pads).
    row = jnp.arange(lp, dtype=jnp.int32) // wp
    col = jnp.arange(lp, dtype=jnp.int32) % wp
    mask = (((row >= 1) & (row <= h) & (col >= 1) & (col <= w))
            .astype(jnp.float32).reshape(1, lp))

    wlat_c = wt_lat.astype(compute_dtype)
    blat2 = b_lat.reshape(cout, 1).astype(jnp.float32)
    wtaps_c = w_taps.astype(compute_dtype)
    brefine2 = b_refine.reshape(cout, 1).astype(jnp.float32)

    in_arrays = [xp, wlat_c, blat2]
    in_specs = [
        pl.BlockSpec((1, cin, lp), lambda i: (i, 0, 0)),
        pl.BlockSpec((cout, cin), lambda i: (0, 0)),         # resident
        pl.BlockSpec((cout, 1), lambda i: (0, 0)),           # resident
    ]
    with_res = res_nchw is not None
    if with_res:
        resp = jnp.pad(res_nchw.astype(jnp.float32),
                       ((0, 0), (0, 0), (1, 2), (1, 1))).reshape(n, cout, lp)
        in_arrays.append(resp)
        in_specs.append(pl.BlockSpec((1, cout, lp), lambda i: (i, 0, 0)))
    in_arrays += [mask, wtaps_c, brefine2]
    in_specs += [
        pl.BlockSpec((1, lp), lambda i: (0, 0)),             # resident
        pl.BlockSpec((9, cout, cout), lambda i: (0, 0, 0)),  # resident
        pl.BlockSpec((cout, 1), lambda i: (0, 0)),           # resident
    ]

    kernel = _make_fused_kernel(cout, l, wp, compute_dtype, with_res)
    outp = pl.pallas_call(
        kernel,
        out_shape=jax.ShapeDtypeStruct((n, cout, l), jnp.float32),
        grid=(n,),
        in_specs=in_specs,
        out_specs=pl.BlockSpec((1, cout, l), lambda i: (i, 0, 0)),
        compiler_params=pltpu.CompilerParams(
            dimension_semantics=("parallel",),
            vmem_limit_bytes=_VMEM_LIMIT),
    )(*in_arrays)
    # TODO(synk): for very large spatial extents add a row-tiled variant with a
    # duplicated 2-row halo so each block still fits the v7x 64 MiB VMEM budget.
    return outp.reshape(n, cout, h, wp)[:, :, :, :w]


def nearest_upsample_nchw(x, out_h, out_w):
    # PyTorch F.interpolate(mode='nearest', size=...): src = floor(dst * in/out)
    # TODO(synk): nearest-neighbour gather stays as JAX glue (pure data movement).
    _, _, h, w = x.shape
    iy = (jnp.arange(out_h) * h) // out_h
    ix = (jnp.arange(out_w) * w) // out_w
    return x[:, :, iy][:, :, :, ix]


# --------------------------------- Module ----------------------------------- #

class FPNPallas:
    """Pallas re-implementation of openpifpaf_extras FPN (single refined level)."""

    def __init__(self, in_channels, out_channels, fpn_level=3, key=None,
                 dtype=jnp.bfloat16):
        if key is None:
            key = jax.random.PRNGKey(0)
        self.num_upsample_ops = len(in_channels) - fpn_level
        self.out_channels = out_channels
        self.dtype = dtype
        self.lateral_wt, self.lateral_b = [], []   # wt: (Cout, Cin) f32 masters
        for i in range(1, 2 + self.num_upsample_ops):
            cin = in_channels[-i]
            key, kw, kb = jax.random.split(key, 3)
            self.lateral_wt.append(
                jax.random.normal(kw, (out_channels, cin), jnp.float32)
                / math.sqrt(cin))
            self.lateral_b.append(
                jax.random.normal(kb, (out_channels,), jnp.float32) * 0.1)
        key, kw, kb = jax.random.split(key, 3)
        self.refine_w = (jax.random.normal(kw, (out_channels, out_channels, 3, 3),
                                           jnp.float32) / math.sqrt(9 * out_channels))
        self.refine_b = jax.random.normal(kb, (out_channels,), jnp.float32) * 0.1
        # Per-tap refine weights for the kernel, tap order t = 3*dy + dx.
        self.refine_wtaps = jnp.stack(
            [self.refine_w[:, :, dy, dx] for dy in range(3) for dx in range(3)],
            axis=0)                                                  # (9, Cout, Cout)

    def __call__(self, inputs_nchw, dtype=None):
        cdt = self.dtype if dtype is None else dtype
        rev = inputs_nchw[::-1]
        n_lat = len(self.lateral_wt)

        # Non-final pyramid levels: 1x1 lateral convs (+fused residual add).
        lat = None
        for idx in range(n_lat - 1):
            x = rev[idx].astype(jnp.float32)
            if idx == 0:
                lat = conv1x1(x, self.lateral_wt[idx], self.lateral_b[idx],
                              compute_dtype=cdt)
            else:
                res = nearest_upsample_nchw(lat, x.shape[2], x.shape[3])
                lat = conv1x1(x, self.lateral_wt[idx], self.lateral_b[idx], res,
                              compute_dtype=cdt)

        # Final level: lateral conv + residual + 3x3 refine fused in one kernel.
        x_last = rev[n_lat - 1].astype(jnp.float32)
        if n_lat > 1:
            res = nearest_upsample_nchw(lat, x_last.shape[2], x_last.shape[3])
        else:
            res = None
        return lateral_refine_fused(x_last, self.lateral_wt[n_lat - 1],
                                    self.lateral_b[n_lat - 1],
                                    self.refine_wtaps, self.refine_b, res,
                                    compute_dtype=cdt)


# ------------------------------ Pure-JAX reference --------------------------- #

def fpn_reference(inputs_nchw, fpn):
    rev = inputs_nchw[::-1]
    lats = []
    for wt, b, x in zip(fpn.lateral_wt, fpn.lateral_b, rev):
        lat = jnp.einsum('nchw,dc->ndhw', x, wt, precision=lax.Precision.HIGHEST)
        lats.append(lat + b[None, :, None, None])
    for i in range(1, 1 + fpn.num_upsample_ops):
        H, W = lats[i].shape[2], lats[i].shape[3]
        h, w_ = lats[i - 1].shape[2], lats[i - 1].shape[3]
        iy = (jnp.arange(H) * h) // H
        ix = (jnp.arange(W) * w_) // W
        lats[i] = lats[i] + lats[i - 1][:, :, iy][:, :, :, ix]
    out = lax.conv_general_dilated(
        lats[-1], fpn.refine_w, (1, 1), ((1, 1), (1, 1)),
        dimension_numbers=('NCHW', 'OIHW', 'NCHW'),
        precision=lax.Precision.HIGHEST)
    return out + fpn.refine_b[None, :, None, None]


# ----------------------------------- Main ------------------------------------ #

if __name__ == "__main__":
    in_channels = [4, 8, 16, 32]
    out_channels = 8
    fpn_level = 2          # -> 2 upsample ops, 3 lateral convs, refined map at stride-8 level
    spatial = [16, 8, 4, 2]
    batch = 2

    fpn = FPNPallas(in_channels, out_channels, fpn_level,
                    key=jax.random.PRNGKey(0), dtype=jnp.bfloat16)

    ikeys = jax.random.split(jax.random.PRNGKey(0), len(in_channels))
    inputs = [jax.random.normal(k, (batch, c, s, s), jnp.float32)
              for k, c, s in zip(ikeys, in_channels, spatial)]

    ref = fpn_reference(inputs, fpn)

    # f32 compute path: tight-tolerance check against the pure-JAX reference.
    out_f32 = jax.block_until_ready(fpn(inputs, dtype=jnp.float32))
    assert out_f32.shape == (batch, out_channels, 8, 8), out_f32.shape
    assert jnp.allclose(out_f32, ref, atol=1e-4, rtol=1e-4)

    # bf16 compute path (default, MXU-friendly): norm-based tolerance.
    out_bf16 = jax.block_until_ready(fpn(inputs))
    assert out_bf16.shape == (batch, out_channels, 8, 8), out_bf16.shape
    rel = jnp.linalg.norm(out_bf16 - ref) / jnp.linalg.norm(ref)
    assert rel < 3e-2, rel

    print("KERNEL_OK")
</pallas_src>

<mosaic_0001>
module attributes {stable_mosaic.version = 11 : i64} {
  func.func @_lateral_kernel(%arg0: i32, %arg1: i32, %arg2: memref<1x32x4xf32, #tpu.memory_space<vmem>>, %arg3: memref<8x32xf32, #tpu.memory_space<vmem>>, %arg4: memref<8x1xf32, #tpu.memory_space<vmem>>, %arg5: memref<1x8x4xf32, #tpu.memory_space<vmem>>) attributes {dimension_semantics = [#tpu.dimension_semantics<parallel>, #tpu.dimension_semantics<parallel>], iteration_bounds = array<i64: 2, 1>, scalar_prefetch = 0 : i64, scratch_operands = 0 : i64, tpu.core_type = #tpu.core_type<tc>, window_params = [{transform_indices = @transform_0, window_bounds = array<i64: 1, 32, 4>}, {pipeline_mode = #tpu.pipeline_mode<synchronous>, transform_indices = @transform_1, window_bounds = array<i64: 8, 32>}, {pipeline_mode = #tpu.pipeline_mode<synchronous>, transform_indices = @transform_2, window_bounds = array<i64: 8, 1>}, {transform_indices = @transform_3, window_bounds = array<i64: 1, 8, 4>}]} {
    %c0 = arith.constant 0 : index
    %c0_0 = arith.constant 0 : index
    %0 = vector.load %arg3[%c0, %c0_0] : memref<8x32xf32, #tpu.memory_space<vmem>>, vector<8x32xf32>
    %c0_1 = arith.constant 0 : index
    %c0_2 = arith.constant 0 : index
    %c0_3 = arith.constant 0 : index
    %1 = vector.load %arg2[%c0_1, %c0_2, %c0_3] : memref<1x32x4xf32, #tpu.memory_space<vmem>>, vector<1x32x4xf32>
    %2 = vector.shape_cast %1 : vector<1x32x4xf32> to vector<32x4xf32>
    %cst = arith.constant dense<0.000000e+00> : vector<8x4xf32>
    %3 = tpu.matmul %0, %2, %cst {dimension_numbers = #tpu.dot_dimension_numbers<[1], [0], [0], [1], [0, 0, 1, 1], [], []>} : vector<8x32xf32>, vector<32x4xf32>, vector<8x4xf32> -> vector<8x4xf32>
    %c0_4 = arith.constant 0 : index
    %c0_5 = arith.constant 0 : index
    %4 = vector.load %arg4[%c0_4, %c0_5] : memref<8x1xf32, #tpu.memory_space<vmem>>, vector<8x1xf32>
    %5 = vector.broadcast %4 : vector<8x1xf32> to vector<8x4xf32>
    %6 = arith.addf %3, %5 : vector<8x4xf32>
    %c0_6 = arith.constant 0 : index
    %c0_7 = arith.constant 0 : index
    %c0_8 = arith.constant 0 : index
    %7 = vector.load %arg5[%c0_6, %c0_7, %c0_8] : memref<1x8x4xf32, #tpu.memory_space<vmem>>, vector<1x8x4xf32>
    %8 = vector.shape_cast %7 : vector<1x8x4xf32> to vector<8x4xf32>
    %9 = vector.shape_cast %6 : vector<8x4xf32> to vector<1x8x4xf32>
    tpu.vector_store %arg5[%c0_6, %c0_7, %c0_8], %9 {strides = array<i32>} : memref<1x8x4xf32, #tpu.memory_space<vmem>>, vector<1x8x4xf32>,
    return
  }
  func.func @transform_0(%arg0: i32, %arg1: i32) -> (i32, i32, i32) {
    %c0_i32 = arith.constant 0 : i32
    %c0_i32_0 = arith.constant 0 : i32
    return %arg0, %c0_i32, %arg1 : i32, i32, i32
  }
  func.func @transform_1(%arg0: i32, %arg1: i32) -> (i32, i32) {
    %c0_i32 = arith.constant 0 : i32
    %c0_i32_0 = arith.constant 0 : i32
    %c0_i32_1 = arith.constant 0 : i32
    return %c0_i32, %c0_i32_0 : i32, i32
  }
  func.func @transform_2(%arg0: i32, %arg1: i32) -> (i32, i32) {
    %c0_i32 = arith.constant 0 : i32
    %c0_i32_0 = arith.constant 0 : i32
    %c0_i32_1 = arith.constant 0 : i32
    return %c0_i32, %c0_i32_0 : i32, i32
  }
  func.func @transform_3(%arg0: i32, %arg1: i32) -> (i32, i32, i32) {
    %c0_i32 = arith.constant 0 : i32
    %c0_i32_0 = arith.constant 0 : i32
    return %arg0, %c0_i32, %arg1 : i32, i32, i32
  }
}

</mosaic_0001>

<llo_original>
// kernel: tpu_custom_call.1
$region0: #{tpu_custom_call.1}
  #allocation0 [shape = 'u32[]', space=smem, size = 0x4, offset = 0x4, fixed_abs, tag = 'smem constant byte address 0x4 - core index']
  #allocation1 [shape = 'u32[144,128]{1,0:T(1,128)}', space=vmem, size = 0x12000, scoped, tag = 'internal scratch']
  %s0 = inlined_call_operand.vmem [shape: f32[2,32,4], index: 0, kind: input, shape index: {}]
  %s1 = inlined_call_operand.vmem [shape: f32[8,32], index: 1, kind: input, shape index: {}]
  %s2 = inlined_call_operand.vmem [shape: f32[8,1], index: 2, kind: input, shape index: {}]
  %s3 = inlined_call_operand.vmem [shape: f32[2,8,4], index: 3, kind: output, shape index: {}]
  %s4 = sld [smem:[#allocation0]]
  $region45: #{tpu_custom_call.1} parent=0
    _
  %s6 = ssub.s32 1, %s4
  %s7 = scalar_select 0, %s6, %s4
  loop: start=0, step=1, limit=4
  $region2: #{tpu_custom_call.1} parent=0 // loop_pre_header
    _
  $region3: #{tpu_custom_call.1} parent=0 // loop_header
    %s9 = sphi 0, %s13
    %p10 = scmp.ge.s32.totalorder %s9, 4
    %s16 = sphi 0, %s28
    %s17 = sphi 0, %s24
    %s18 = sphi 0, %s16
    %s19 = sphi 0, %s17
    %s20 = sphi 0, %s18
    %s21 = sphi 0, %s19
    %s33 = sphi 0, %s35
    %s36 = sphi 0, %s33
    %s37 = sphi 0, %s36
    %s53 = sphi 0, %s37
    %s57 = sphi 0, %s57
    %s59 = sphi 0, %s57
    %s60 = sphi 0, %s59
    %s74 = sphi 0, %s60
    %s78 = sphi 0, %s78
    %s80 = sphi 0, %s78
    %s81 = sphi 0, %s80
    %s95 = sphi 0, %s81
    %s103 = sphi 0, %s105
    %s106 = sphi 0, %s103
    %s107 = sphi 0, %s106
    %s123 = sphi 0, %s107
  $region4: #{tpu_custom_call.1} parent=0 // loop_header_branch
    %12 = sbr.rel (%p10) target = $region8
  $region5: #{tpu_custom_call.1} parent=0 // loop_body
    %s14 = ssub.s32 %s9, 1
    %s15 = ssub.s32 %s9, 2
    %s22 = sadd.s32 1, %s17
    %p23 = scmp.ge.s32.totalorder %s22, 1
    %s24 = scalar_select %p23, 0, %s22
    %s25 = sadd.s32 1, %s16
    %s26 = scalar_select %p23, %s25, %s16
    %p27 = scmp.ge.s32.totalorder %s26, 2
    %s28 = scalar_select %p27, 0, %s26
    %s29 = ssub.s32 %s16, %s28
    %s30 = ssub.s32 %s17, %s24
    %s31 = sor.u32 %s29, %s30
    %p32 = scmp.eq.s32.totalorder %s31, 0
    %s34 = sadd.s32 %s33, 1
    %s35 = scalar_select %p32, %s33, %s34
    %p38 = pneg %p32
    %p39 = scmp.eq.s32.totalorder %s9, 1
    %p40 = por %p38, %p39
    %p41 = scmp.ne.s32.totalorder %s33, %s36
    %p42 = scmp.eq.s32.totalorder %s9, 0
    %p43 = por %p41, %p42
    %p44 = scmp.ne.s32.totalorder %s33, %s36
    %p45 = scmp.eq.s32.totalorder %s14, 1
    %p46 = por %p44, %p45
    %p47 = scmp.ne.s32.totalorder %s36, %s37
    %p48 = scmp.eq.s32.totalorder %s14, 0
    %p49 = por %p47, %p48
    %p50 = scmp.ne.s32.totalorder %s36, %s37
    %p51 = scmp.eq.s32.totalorder %s15, 1
    %p52 = por %p50, %p51
    %p54 = scmp.ne.s32.totalorder %s37, %s53
    %p55 = scmp.eq.s32.totalorder %s15, 0
    %p56 = por %p54, %p55
    %s58 = sadd.s32 %s57, 1
    %p61 = scmp.eq.s32.totalorder %s9, 1
    %p62 = scmp.ne.s32.totalorder %s57, %s59
    %p63 = scmp.eq.s32.totalorder %s9, 0
    %p64 = por %p62, %p63
    %p65 = scmp.ne.s32.totalorder %s57, %s59
    %p66 = scmp.eq.s32.totalorder %s14, 1
    %p67 = por %p65, %p66
    %p68 = scmp.ne.s32.totalorder %s59, %s60
    %p69 = scmp.eq.s32.totalorder %s14, 0
    %p70 = por %p68, %p69
    %p71 = scmp.ne.s32.totalorder %s59, %s60
    %p72 = scmp.eq.s32.totalorder %s15, 1
    %p73 = por %p71, %p72
    %p75 = scmp.ne.s32.totalorder %s60, %s74
    %p76 = scmp.eq.s32.totalorder %s15, 0
    %p77 = por %p75, %p76
    %s79 = sadd.s32 %s78, 1
    %p82 = scmp.eq.s32.totalorder %s9, 1
    %p83 = scmp.ne.s32.totalorder %s78, %s80
    %p84 = scmp.eq.s32.totalorder %s9, 0
    %p85 = por %p83, %p84
    %p86 = scmp.ne.s32.totalorder %s78, %s80
    %p87 = scmp.eq.s32.totalorder %s14, 1
    %p88 = por %p86, %p87
    %p89 = scmp.ne.s32.totalorder %s80, %s81
    %p90 = scmp.eq.s32.totalorder %s14, 0
    %p91 = por %p89, %p90
    %p92 = scmp.ne.s32.totalorder %s80, %s81
    %p93 = scmp.eq.s32.totalorder %s15, 1
    %p94 = por %p92, %p93
    %p96 = scmp.ne.s32.totalorder %s81, %s95
    %p97 = scmp.eq.s32.totalorder %s15, 0
    %p98 = por %p96, %p97
    %s99 = ssub.s32 %s16, %s28
    %s100 = ssub.s32 %s17, %s24
    %s101 = sor.u32 %s99, %s100
    %p102 = scmp.eq.s32.totalorder %s101, 0
    %s104 = sadd.s32 %s103, 1
    %s105 = scalar_select %p102, %s103, %s104
    %p108 = pneg %p102
    %p109 = scmp.eq.s32.totalorder %s9, 1
    %p110 = por %p108, %p109
    %p111 = scmp.ne.s32.totalorder %s103, %s106
    %p112 = scmp.eq.s32.totalorder %s9, 0
    %p113 = por %p111, %p112
    %p114 = scmp.ne.s32.totalorder %s103, %s106
    %p115 = scmp.eq.s32.totalorder %s14, 1
    %p116 = por %p114, %p115
    %p117 = scmp.ne.s32.totalorder %s106, %s107
    %p118 = scmp.eq.s32.totalorder %s14, 0
    %p119 = por %p117, %p118
    %p120 = scmp.ne.s32.totalorder %s106, %s107
    %p121 = scmp.eq.s32.totalorder %s15, 1
    %p122 = por %p120, %p121
    %p124 = scmp.ne.s32.totalorder %s107, %s123
    %p125 = scmp.eq.s32.totalorder %s15, 0
    %p126 = por %p124, %p125
    %p127 = scmp.le.s32.totalorder 1, %s9
    %p128 = scmp.lt.s32.totalorder %s9, 3
    %p129 = pnand %p127, %p128
    %p130 = pneg %p129
    // Predicated region
    $region9: #{tpu_custom_call.1} parent=5 // pred_check
      _
    $region10: #{tpu_custom_call.1} parent=5 // pred_check_branch
      %132 = sbr.rel (%p129) target = $region12
    $region11: #{tpu_custom_call.1} parent=5 // pred_region
      %s133 = ssub.s32 %s9, 1
      // Predicated region
      $region13: #{tpu_custom_call.1} parent=11 // pred_check
        %p134 = pneg %p70
      $region14: #{tpu_custom_call.1} parent=11 // pred_check_branch
        %136 = sbr.rel (%p134) target = $region16
      $region15: #{tpu_custom_call.1} parent=11 // pred_region
        _
      $region16: #{tpu_custom_call.1} parent=11 // pred_fallthru
        _
      // Predicated region
      $region17: #{tpu_custom_call.1} parent=11 // pred_check
        %p137 = pneg %p91
      $region18: #{tpu_custom_call.1} parent=11 // pred_check_branch
        %139 = sbr.rel (%p137) target = $region20
      $region19: #{tpu_custom_call.1} parent=11 // pred_region
        _
      $region20: #{tpu_custom_call.1} parent=11 // pred_fallthru
        _
    $region12: #{tpu_custom_call.1} parent=5 // pred_fallthru
      _
    %p140 = scmp.lt.s32.totalorder %s9, 2
    // Predicated region
    $region21: #{tpu_custom_call.1} parent=5 // pred_check
      %p141 = pneg %p140
    $region22: #{tpu_custom_call.1} parent=5 // pred_check_branch
      %143 = sbr.rel (%p141) target = $region24
    $region23: #{tpu_custom_call.1} parent=5 // pred_region
      // Predicated region
      $region25: #{tpu_custom_call.1} parent=23 // pred_check
        %p144 = pneg %p43
      $region26: #{tpu_custom_call.1} parent=23 // pred_check_branch
        %146 = sbr.rel (%p144) target = $region28
      $region27: #{tpu_custom_call.1} parent=23 // pred_region
        %p147 = scmp.lt.s32.totalorder %s16, 1
        %s148 = scalar_select %p147, %s16, 1
        %p149 = scmp.lt.s32.totalorder %s17, 0
        %s150 = scalar_select %p149, %s17, 0
        %s151 = smul.addr %s148, 4
        %s152 = sadd.s32 %s150, %s151
        %s153 = smul.addr %s152, 8
        %s154 = scalar_lea.vmem %s0, %s153
      $region28: #{tpu_custom_call.1} parent=23 // pred_fallthru
        _
    $region24: #{tpu_custom_call.1} parent=5 // pred_fallthru
      _
    %p155 = scmp.le.s32.totalorder 1, %s9
    %p156 = scmp.lt.s32.totalorder %s9, 3
    %p157 = pnand %p155, %p156
    %p158 = pneg %p157
    // Predicated region
    $region29: #{tpu_custom_call.1} parent=5 // pred_check
      _
    $region30: #{tpu_custom_call.1} parent=5 // pred_check_branch
      %160 = sbr.rel (%p157) target = $region32
    $region31: #{tpu_custom_call.1} parent=5 // pred_region
      %s161 = ssub.s32 %s9, 1
      %p162 = scmp.lt.s32.totalorder %s18, 1
      %s163 = scalar_select %p162, %s18, 1
      %p164 = scmp.lt.s32.totalorder %s19, 0
      %s165 = scalar_select %p164, %s19, 0
      %s166 = smul.addr %s163, 4
      %s167 = sadd.s32 %s165, %s166
      %s168 = smul.addr %s167, 8
      %s169 = scalar_lea.vmem %s0, %s168
      %p170 = pneg %p49
      %p171 = pneg %p46
      %p172 = pneg %p70
      %p173 = pneg %p67
      %p174 = pneg %p91
      %p175 = pneg %p88
      %p176 = pneg %p119
      %p177 = pneg %p116
      %p178 = scmp.lt.s32.totalorder %s18, 1
      %s179 = scalar_select %p178, %s18, 1
      %p180 = scmp.lt.s32.totalorder %s19, 0
      %s181 = scalar_select %p180, %s19, 0
      %s182 = sadd.s32 %s181, %s179
      %s183 = smul.addr %s182, 8
      %s184 = scalar_lea.vmem %s3, %s183
      %p185 = scmp.lt.s32.totalorder %s18, 1
      %s186 = scalar_select %p185, %s18, 1
      %p187 = scmp.lt.s32.totalorder %s19, 0
      %s188 = scalar_select %p187, %s19, 0
      %s189 = smul.addr %s186, 4
      %s190 = sadd.s32 %s188, %s189
      %s191 = smul.addr %s190, 8
      %s192 = scalar_lea.vmem %s0, %s191
      %p193 = scmp.lt.s32.totalorder %s18, 1
      %s194 = scalar_select %p193, %s18, 1
      %p195 = scmp.lt.s32.totalorder %s19, 0
      %s196 = scalar_select %p195, %s19, 0
      %s197 = sadd.s32 %s196, %s194
      %s198 = smul.addr %s197, 8
      %s199 = scalar_lea.vmem %s3, %s198
      %v200 = vld [vmem:[%s1] sm:$0xff]
      %v201 = vld [vmem:[%s192] sm:$0xff]
      %v202 = vld [vmem:[%s192 + $0x8] sm:$0xff]
      %v203 = vld [vmem:[%s192 + $0x10] sm:$0xff]
      %v204 = vld [vmem:[%s192 + $0x18] sm:$0xff]
      %v205 = vld [vmem:[%s2] sm:$0xff]
      %207 = vset.pattern.permute.xlu0 0
      %208 = vperm.xlu0 %207, %v205
      %v209 = vpop.permute.xlu0 %208
      %vm211 = vcmask 261120
      %v213 = vsel %vm211, %v200, 0
      %215 = vmatprep.subr.mxu0 0.0
      %216 = vmatpush1.msra.mxu0 %v201
      %217 = vmatprep.subr.mxu0 0.0
      %218 = vmatpush1.msra.mxu0 %v202
      %219 = vmatprep.subr.mxu0 0.0
      %220 = vmatpush1.msra.mxu0 %v203
      %221 = vmatprep.subr.mxu0 0.0
      %222 = vmatpush1.msra.mxu0 %v204
      %223 = vmatprep.subr.mxu0 0.0
      %224 = vmatpush1.msra.mxu0 0.0
      %225 = vmatprep.subr.mxu0 0.0
      %226 = vmatpush1.msra.mxu0 0.0
      %227 = vmatprep.subr.mxu0 0.0
      %228 = vmatpush1.msra.mxu0 0.0
      %229 = vmatprep.subr.mxu0 0.0
      %230 = vmatpush1.msra.mxu0 0.0
      %231 = vmatprep.subr.mxu0 0.0
      %232 = vmatpush1.msra.mxu0 0.0
      %233 = vmatprep.subr.mxu0 0.0
      %234 = vmatpush1.msra.mxu0 0.0
      %235 = vmatprep.subr.mxu0 0.0
      %236 = vmatpush1.msra.mxu0 0.0
      %237 = vmatprep.subr.mxu0 0.0
      %238 = vmatpush1.msra.mxu0 0.0
      %239 = vmatprep.subr.mxu0 0.0
      %240 = vmatpush1.msra.mxu0 0.0
      %241 = vmatprep.subr.mxu0 0.0
      %242 = vmatpush1.msra.mxu0 0.0
      %243 = vmatprep.subr.mxu0 0.0
      %244 = vmatpush1.msra.mxu0 0.0
      %245 = vmatprep.subr.mxu0 0.0
      %246 = vmatpush1.msra.mxu0 0.0
      %247 = vmatprep.subr.mxu0 0.0
      %248 = vmatpush1.msra.mxu0 0.0
      %249 = vmatprep.subr.mxu0 0.0
      %250 = vmatpush1.msra.mxu0 0.0
      %251 = vmatprep.subr.mxu0 0.0
      %252 = vmatpush1.msra.mxu0 0.0
      %253 = vmatprep.subr.mxu0 0.0
      %254 = vmatpush1.msra.mxu0 0.0
      %255 = vmatprep.subr.mxu0 0.0
      %256 = vmatpush1.msra.mxu0 0.0
      %257 = vmatprep.subr.mxu0 0.0
      %258 = vmatpush1.msra.mxu0 0.0
      %259 = vmatprep.subr.mxu0 0.0
      %260 = vmatpush1.msra.mxu0 0.0
      %261 = vmatprep.subr.mxu0 0.0
      %262 = vmatpush1.msra.mxu0 0.0
      %263 = vmatprep.subr.mxu0 0.0
      %264 = vmatpush1.msra.mxu0 0.0
      %265 = vmatprep.subr.mxu0 0.0
      %266 = vmatpush1.msra.mxu0 0.0
      %267 = vmatprep.subr.mxu0 0.0
      %268 = vmatpush1.msra.mxu0 0.0
      %269 = vmatprep.subr.mxu0 0.0
      %270 = vmatpush1.msra.mxu0 0.0
      %271 = vmatprep.subr.mxu0 0.0
      %272 = vmatpush1.msra.mxu0 0.0
      %273 = vmatprep.subr.mxu0 0.0
      %274 = vmatpush1.msra.mxu0 0.0
      %275 = vmatprep.subr.mxu0 0.0
      %276 = vmatpush1.msra.mxu0 0.0
      %277 = vmatprep.subr.mxu0 0.0
      %278 = vmatpush1.msra.mxu0 0.0
      %279 = vmatprep.mubr.f32.mxu0 0.0
      %280 = vmatmul.mubr.f32.gmra.mrb[0].mxu0 %v213
      %v281 = vpop.f32.mrb[0].mxu0
      %v282 = vadd.f32 %v209, %v281
      %v283 = vpop.f32.mrb[0].mxu0
      %284 = vdwg.mxu0
      %vm285 = vcmask 31744
      %286 = vst.msk [vmem:[%s199] sm:$0xff] %vm285, %v282
      %p287 = scmp.lt.s32.totalorder %s18, 1
      %s288 = scalar_select %p287, %s18, 1
      %p289 = scmp.lt.s32.totalorder %s19, 0
      %s290 = scalar_select %p289, %s19, 0
      %s291 = sadd.s32 %s290, %s288
      %s292 = smul.addr %s291, 8
      %s293 = scalar_lea.vmem %s3, %s292
      // Predicated region
      $region33: #{tpu_custom_call.1} parent=31 // pred_check
        %p294 = pneg %p116
      $region34: #{tpu_custom_call.1} parent=31 // pred_check_branch
        %296 = sbr.rel (%p294) target = $region36
      $region35: #{tpu_custom_call.1} parent=31 // pred_region
        _
      $region36: #{tpu_custom_call.1} parent=31 // pred_fallthru
        _
    $region32: #{tpu_custom_call.1} parent=5 // pred_fallthru
      _
    %p297 = scmp.le.s32.totalorder 2, %s9
    // Predicated region
    $region37: #{tpu_custom_call.1} parent=5 // pred_check
      %p298 = pneg %p297
    $region38: #{tpu_custom_call.1} parent=5 // pred_check_branch
      %300 = sbr.rel (%p298) target = $region40
    $region39: #{tpu_custom_call.1} parent=5 // pred_region
      %s301 = ssub.s32 %s9, 2
      // Predicated region
      $region41: #{tpu_custom_call.1} parent=39 // pred_check
        %p302 = pneg %p122
      $region42: #{tpu_custom_call.1} parent=39 // pred_check_branch
        %304 = sbr.rel (%p302) target = $region44
      $region43: #{tpu_custom_call.1} parent=39 // pred_region
        %p305 = scmp.lt.s32.totalorder %s20, 1
        %s306 = scalar_select %p305, %s20, 1
        %p307 = scmp.lt.s32.totalorder %s21, 0
        %s308 = scalar_select %p307, %s21, 0
        %s309 = sadd.s32 %s308, %s306
        %s310 = smul.addr %s309, 8
        %s311 = scalar_lea.vmem %s3, %s310
      $region44: #{tpu_custom_call.1} parent=39 // pred_fallthru
        _
    $region40: #{tpu_custom_call.1} parent=5 // pred_fallthru
      _
  $region6: #{tpu_custom_call.1} parent=0 // loop_footer
    %s13 = sadd.s32 1, %s9
  $region7: #{tpu_custom_call.1} parent=0 // loop_footer_branch
    %8 = sbr.rel target = $region3
  $region8: #{tpu_custom_call.1} parent=0 // loop_exit
    _

</llo_original>
